<compile_context>
chip_gen: v7x
topology: tpu7x:2x2x1
jax: 0.10.0
libtpu: 0.0.40
codegen_flags: <defaults>
</compile_context>

<pallas_src>
import jax
import jax.numpy as jnp
from jax.experimental import pallas as pl
from jax.experimental.pallas import tpu as pltpu


def _scale_bias_relu_kernel(w_ref, b_ref, x_ref, o_ref):
    # w_ref / b_ref: (1, 1) scalars in SMEM; x_ref / o_ref: (TM, LANE_W) VMEM tiles.
    w = w_ref[0, 0]
    b = b_ref[0, 0]
    o_ref[...] = jnp.maximum(x_ref[...] * w + b, jnp.float32(0.0))


def _choose_layout(total):
    """Pick a lane-dense 2D layout and row-tile size for `total` f32 elements."""
    # Lane width: multiple of 128, grown up to 2048 while there is enough data
    # to keep at least 8 sublane-rows (keeps stores unmasked and DMAs wide).
    lane_w = 128
    while lane_w < 2048 and total >= lane_w * 2 * 8:
        lane_w *= 2
    # Pad so rows is a multiple of 8 (fully dense vregs / unmasked stores).
    padded = -(-total // (8 * lane_w)) * (8 * lane_w)
    rows = padded // lane_w
    # Row tile: big enough to amortize per-grid-step overhead, small enough that
    # double-buffered in+out (4 * TM * lane_w * 4 B) stays << 16 MiB (v5e-safe).
    tm = rows if rows <= 256 else 256
    return lane_w, padded, rows, tm


def cnn1_forward(x_nchw, weight, bias):
    """Forward pass of CNN1.

    Args:
      x_nchw: float32 array of shape (N, 1, H, W)  (NCHW, matching PyTorch).
      weight: float32 array of shape (1, 1, 1, 1)  (Conv2d(1,1,1) weight).
      bias:   float32 array of shape (1,)          (Conv2d bias).

    Returns:
      float32 array of shape (N, H*W)  (== reshape(N, C*H*W) since C == 1).
    """
    n, c, h, w = x_nchw.shape
    assert c == 1, "CNN1 uses Conv2d(1, 1, 1)"
    total = n * c * h * w

    lane_w, padded, rows, tm = _choose_layout(total)

    x_flat = x_nchw.reshape(-1).astype(jnp.float32)
    if padded != total:
        x_flat = jnp.pad(x_flat, (0, padded - total))
    x2d = x_flat.reshape(rows, lane_w)

    w_s = weight.reshape(1, 1).astype(jnp.float32)
    b_s = bias.reshape(1, 1).astype(jnp.float32)

    out2d = pl.pallas_call(
        _scale_bias_relu_kernel,
        out_shape=jax.ShapeDtypeStruct((rows, lane_w), jnp.float32),
        grid=(pl.cdiv(rows, tm),),
        in_specs=[
            pl.BlockSpec(memory_space=pltpu.MemorySpace.SMEM),   # weight scalar
            pl.BlockSpec(memory_space=pltpu.MemorySpace.SMEM),   # bias scalar
            pl.BlockSpec((tm, lane_w), lambda i: (i, 0)),        # x tile
        ],
        out_specs=pl.BlockSpec((tm, lane_w), lambda i: (i, 0)),
        compiler_params=pltpu.CompilerParams(
            dimension_semantics=("parallel",),        # shard rows across TCs on v7x
            vmem_limit_bytes=32 * 1024 * 1024,        # safe on v5e/v6e/v7x
        ),
        cost_estimate=pl.CostEstimate(
            flops=2 * total,
            transcendentals=0,
            bytes_accessed=2 * padded * 4,            # read + write, f32
        ),
    )(w_s, b_s, x2d)

    # Drop the padding and restore the PyTorch (N, C*H*W) flattened layout.
    return out2d.reshape(-1)[:total].reshape(n, c * h * w)


def cnn1_reference(x_nchw, weight, bias):
    # Pure-JAX reference: 1x1 conv (scalar scale + bias), ReLU, flatten.
    y = x_nchw * weight.reshape(()) + bias.reshape(())
    y = jnp.maximum(y, 0.0)
    n = x_nchw.shape[0]
    return y.reshape(n, -1)


if __name__ == "__main__":
    key = jax.random.PRNGKey(0)
    k_x, k_w, k_b = jax.random.split(key, 3)

    # Small shapes consistent with the module: batch=2, C=1, H=W=16.
    N, C, H, W = 2, 1, 16, 16
    x = jax.random.normal(k_x, (N, C, H, W), dtype=jnp.float32)

    # Deterministic parameter init (Conv2d(1,1,1): weight (1,1,1,1), bias (1,)).
    weight = jax.random.normal(k_w, (1, 1, 1, 1), dtype=jnp.float32) * 0.5
    bias = jax.random.normal(k_b, (1,), dtype=jnp.float32) * 0.1

    out = cnn1_forward(x, weight, bias)
    out = jax.block_until_ready(out)

    ref = cnn1_reference(x, weight, bias)
    assert out.shape == (N, C * H * W), out.shape
    assert jnp.allclose(out, ref, atol=1e-5, rtol=1e-5), "mismatch vs reference"

    print("KERNEL_OK")
</pallas_src>

<mosaic_0001>
module attributes {stable_mosaic.version = 11 : i64} {
  func.func @_scale_bias_relu_kernel(%arg0: i32, %arg1: memref<1x1xf32, #tpu.memory_space<smem>>, %arg2: memref<1x1xf32, #tpu.memory_space<smem>>, %arg3: memref<8x128xf32, #tpu.memory_space<vmem>>, %arg4: memref<8x128xf32, #tpu.memory_space<vmem>>) attributes {dimension_semantics = [#tpu.dimension_semantics<parallel>], iteration_bounds = array<i64: 1>, scalar_prefetch = 0 : i64, scratch_operands = 0 : i64, tpu.core_type = #tpu.core_type<tc>, window_params = [{transform_indices = @transform_0, window_bounds = array<i64: 1, 1>}, {transform_indices = @transform_1, window_bounds = array<i64: 1, 1>}, {transform_indices = @transform_2, window_bounds = array<i64: 8, 128>}, {transform_indices = @transform_3, window_bounds = array<i64: 8, 128>}]} {
    %c0 = arith.constant 0 : index
    %c0_0 = arith.constant 0 : index
    %0 = memref.load %arg1[%c0, %c0_0] : memref<1x1xf32, #tpu.memory_space<smem>>
    %c0_1 = arith.constant 0 : index
    %c0_2 = arith.constant 0 : index
    %1 = memref.load %arg2[%c0_1, %c0_2] : memref<1x1xf32, #tpu.memory_space<smem>>
    %c0_3 = arith.constant 0 : index
    %c0_4 = arith.constant 0 : index
    %2 = vector.load %arg3[%c0_3, %c0_4] : memref<8x128xf32, #tpu.memory_space<vmem>>, vector<8x128xf32>
    %3 = vector.broadcast %0 : f32 to vector<8x128xf32>
    %4 = arith.mulf %2, %3 : vector<8x128xf32>
    %5 = vector.broadcast %1 : f32 to vector<8x128xf32>
    %6 = arith.addf %4, %5 : vector<8x128xf32>
    %cst = arith.constant 0.000000e+00 : f32
    %7 = vector.broadcast %cst : f32 to vector<8x128xf32>
    %8 = arith.maximumf %6, %7 : vector<8x128xf32>
    %c0_5 = arith.constant 0 : index
    %c0_6 = arith.constant 0 : index
    %9 = vector.load %arg4[%c0_5, %c0_6] : memref<8x128xf32, #tpu.memory_space<vmem>>, vector<8x128xf32>
    tpu.vector_store %arg4[%c0_5, %c0_6], %8 {strides = array<i32>} : memref<8x128xf32, #tpu.memory_space<vmem>>, vector<8x128xf32>,
    return
  }
  func.func @transform_0(%arg0: i32) -> (i32, i32) {
    %c0_i32 = arith.constant 0 : i32
    %c0_i32_0 = arith.constant 0 : i32
    %c0_i32_1 = arith.constant 0 : i32
    return %c0_i32, %c0_i32_0 : i32, i32
  }
  func.func @transform_1(%arg0: i32) -> (i32, i32) {
    %c0_i32 = arith.constant 0 : i32
    %c0_i32_0 = arith.constant 0 : i32
    %c0_i32_1 = arith.constant 0 : i32
    return %c0_i32, %c0_i32_0 : i32, i32
  }
  func.func @transform_2(%arg0: i32) -> (i32, i32) {
    %c0_i32 = arith.constant 0 : i32
    %c0_i32_0 = arith.constant 0 : i32
    return %arg0, %c0_i32 : i32, i32
  }
  func.func @transform_3(%arg0: i32) -> (i32, i32) {
    %c0_i32 = arith.constant 0 : i32
    %c0_i32_0 = arith.constant 0 : i32
    return %arg0, %c0_i32 : i32, i32
  }
}

</mosaic_0001>

<llo_original>
// kernel: tpu_custom_call.1
$region0: #{tpu_custom_call.1}
  #allocation0 [shape = 'u32[]', space=smem, size = 0x4, offset = 0x4, fixed_abs, tag = 'smem constant byte address 0x4 - core index']
  #allocation1 [shape = 'u32[144,128]{1,0:T(1,128)}', space=vmem, size = 0x12000, scoped, tag = 'internal scratch']
  #allocation2 [shape = 'f32[1,1]{1,0:T(1,128)S(6)}', space=smem, size = 0x200, scoped, tag = 'scoped memory for tpu_custom_call.1']
  #allocation3 [shape = 'f32[1,1]{1,0:T(1,128)S(6)}', space=smem, size = 0x200, scoped, tag = 'scoped memory for tpu_custom_call.1']
  %s0 = inlined_call_operand.<no memory space> [shape: f32[1,1], index: 0, kind: input, shape index: {}]
  %s1 = inlined_call_operand.<no memory space> [shape: f32[1,1], index: 1, kind: input, shape index: {}]
  %s2 = inlined_call_operand.hbm [shape: f32[8,128], index: 2, kind: input, shape index: {}]
  %s3 = inlined_call_operand.hbm [shape: f32[8,128], index: 3, kind: output, shape index: {}]
  %s4 = sld [smem:[#allocation0]]
  $region26: #{tpu_custom_call.1} parent=0
    _
  %s6 = ssub.s32 1, %s4
  %s7 = scalar_select 0, %s6, %s4
  %8 = sst [smem:[#allocation2]] %s0
  %9 = sst [smem:[#allocation3]] %s1
  $region1: #{tpu_custom_call.1} parent=0
    #allocation4 [shape = 'u8[4096]{0}', space=vmem, size = 0x1000, scoped, tag = 'input window, operand 2, single buffered']
    #allocation5 [shape = 's32[1]{0}', space=sflag, size = 0x4, scoped, tag = 'scoped memory for tpu_custom_call.1']
    #allocation6 [shape = 's32[1]{0}', space=sflag, size = 0x4, scoped, tag = 'scoped memory for tpu_custom_call.1']
    #allocation7 [shape = 'u8[4096]{0}', space=vmem, size = 0x1000, scoped, tag = 'output window, operand 0, single buffered']
    %10 = vsyncpa [#allocation5], 0
    %11 = vsyncpa [#allocation6], 0
    // Predicated region
    $region2: #{tpu_custom_call.1} parent=1 // pred_check
      _
    $region3: #{tpu_custom_call.1} parent=1 // pred_check_branch
      %13 = sbr.rel (0) target = $region5
    $region4: #{tpu_custom_call.1} parent=1 // pred_region
      _
    $region5: #{tpu_custom_call.1} parent=1 // pred_fallthru
      _
    // Predicated region
    $region6: #{tpu_custom_call.1} parent=1 // pred_check
      _
    $region7: #{tpu_custom_call.1} parent=1 // pred_check_branch
      %15 = sbr.rel (0) target = $region9
    $region8: #{tpu_custom_call.1} parent=1 // pred_region
      _
    $region9: #{tpu_custom_call.1} parent=1 // pred_fallthru
      _
    // Predicated region
    $region10: #{tpu_custom_call.1} parent=1 // pred_check
      _
    $region11: #{tpu_custom_call.1} parent=1 // pred_check_branch
      %17 = sbr.rel (0) target = $region13
    $region12: #{tpu_custom_call.1} parent=1 // pred_region
      %s19 = ssub.s32 128, 128
      %20 = vsyncadd [#allocation5], %s19
      %s22 = sshll.u32 [#allocation4], 4
      %s23 = int_to_ptr.vmem [resolvable:$true] %s22
      %25 = dma.hbm_to_vmem [thread:$0]  %s2, 128, %s23, [#allocation5]
    $region13: #{tpu_custom_call.1} parent=1 // pred_fallthru
      _
    // Predicated region
    $region14: #{tpu_custom_call.1} parent=1 // pred_check
      _
    $region15: #{tpu_custom_call.1} parent=1 // pred_check_branch
      %27 = sbr.rel (0) target = $region17
    $region16: #{tpu_custom_call.1} parent=1 // pred_region
      %28 = dma.done [#allocation5], 128
    $region17: #{tpu_custom_call.1} parent=1 // pred_fallthru
      _
    %s29 = sld [smem:[#allocation2]]
    %s30 = sld [smem:[#allocation3]]
    %v31 = vld [vmem:[#allocation4] sm:$0xff]
    %v32 = vstv %s29
    %v33 = vmul.f32 %v31, %v32
    %v34 = vstv %s30
    %v35 = vadd.f32 %v33, %v34
    %v36 = vmax.f32 %v35, 0.0
    %37 = vst [vmem:[#allocation7] sm:$0xff] %v36
    // Predicated region
    $region18: #{tpu_custom_call.1} parent=1 // pred_check
      _
    $region19: #{tpu_custom_call.1} parent=1 // pred_check_branch
      %39 = sbr.rel (0) target = $region21
    $region20: #{tpu_custom_call.1} parent=1 // pred_region
      %s41 = ssub.s32 128, 128
      %42 = vsyncadd [#allocation6], %s41
      %s44 = sshll.u32 [#allocation7], 4
      %s45 = int_to_ptr.vmem [resolvable:$true] %s44
      %47 = dma.vmem_to_hbm [thread:$0]  %s45, 128, %s3, [#allocation6]
    $region21: #{tpu_custom_call.1} parent=1 // pred_fallthru
      _
    // Predicated region
    $region22: #{tpu_custom_call.1} parent=1 // pred_check
      _
    $region23: #{tpu_custom_call.1} parent=1 // pred_check_branch
      %49 = sbr.rel (0) target = $region25
    $region24: #{tpu_custom_call.1} parent=1 // pred_region
      %50 = dma.done [#allocation6], 128
    $region25: #{tpu_custom_call.1} parent=1 // pred_fallthru
      _
    %51 = vsyncpa [#allocation5], 1
    %52 = vsyncpa [#allocation6], 1

</llo_original>
